<compile_context>
chip_gen: v7x
topology: tpu7x:2x2x1
jax: 0.10.0
libtpu: 0.0.40
codegen_flags: <defaults>
</compile_context>

<pallas_src>
import jax
import jax.numpy as jnp
from jax.experimental import pallas as pl
from jax.experimental.pallas import tpu as pltpu


def bilstm_forward(tokens, params):
    """tokens: (B, T) int32 -> logits (B, out_features) float32."""
    B, T = tokens.shape
    E = params["w_ih_f"].shape[0]
    H = params["w_hh_f"].shape[0]
    H4 = 4 * H
    O = params["w_out"].shape[1]
    Bp = max(8, -(-B // 8) * 8)            # batch padded to the 8-sublane tile

    # JAX-side glue: embedding gathered directly in time-major order, batch
    # padded with zero rows so per-step row blocks align to (8, 128) tiles.
    # TODO(synk): for very large vocab/B, gather in-kernel via scalar prefetch.
    x_tm = params["embedding"][tokens.T]                                 # (T, B, E) f32
    if Bp != B:
        x_tm = jnp.pad(x_tm, ((0, 0), (0, Bp - B), (0, 0)))
    x2d = x_tm.reshape(T * Bp, E).astype(jnp.bfloat16)                   # (T*Bp, E)

    # Stack fwd + bwd input projections -> one 8H(=256)-wide matmul; fold biases.
    w_in = jnp.concatenate([params["w_ih_f"], params["w_ih_b"]],
                           axis=1).astype(jnp.bfloat16)                  # (E, 8H)
    b_in = jnp.concatenate([params["b_f"], params["b_b"]],
                           axis=1).astype(jnp.float32)                   # (1, 8H)
    w_hh_f = params["w_hh_f"].astype(jnp.bfloat16)                       # (H, 4H)
    w_out = params["w_out"].astype(jnp.float32)                          # (2H, O)
    b_out = params["b_out"].astype(jnp.float32)                          # (1, O)

    def kernel(x_ref, w_in_ref, b_in_ref, whh_ref, wout_ref, bout_ref, y_ref):
        # ---- hoisted input projection for BOTH directions (one MXU op) ----
        gx = (jnp.dot(x_ref[...], w_in_ref[...],
                      preferred_element_type=jnp.float32)
              + b_in_ref[...])                                           # (T*Bp, 8H) f32

        # ---- reverse direction at lstm_out[-1]: single step from zero state ----
        gb = gx[(T - 1) * Bp:T * Bp, H4:]                                # (Bp, 4H), vreg-aligned
        c_b = jax.nn.sigmoid(gb[:, 0:H]) * jnp.tanh(gb[:, 2 * H:3 * H])  # i * g
        h_b = jax.nn.sigmoid(gb[:, 3 * H:4 * H]) * jnp.tanh(c_b)         # o * tanh(c)

        # ---- forward recurrence: only h @ W_hh_f per step (T static, unrolled) ----
        whh = whh_ref[...]                                               # load once (bf16)
        h = jnp.zeros((Bp, H), jnp.float32)
        c = jnp.zeros((Bp, H), jnp.float32)
        for t in range(T):
            gates = gx[t * Bp:(t + 1) * Bp, 0:H4] + jnp.dot(
                h.astype(whh.dtype), whh, preferred_element_type=jnp.float32)
            i = jax.nn.sigmoid(gates[:, 0:H])
            f = jax.nn.sigmoid(gates[:, H:2 * H])
            g = jnp.tanh(gates[:, 2 * H:3 * H])
            o = jax.nn.sigmoid(gates[:, 3 * H:4 * H])
            c = f * c + i * g
            h = o * jnp.tanh(c)

        final = jnp.concatenate([h, h_b], axis=-1)                       # (Bp, 2H) f32
        y = jnp.dot(final, wout_ref[...],
                    preferred_element_type=jnp.float32) + bout_ref[...]  # (Bp, O)
        y_ref[...] = y[0:B, :]

    vmem = pl.BlockSpec(memory_space=pltpu.MemorySpace.VMEM)
    # TODO(synk): for large B/T, add a batch-tile grid axis marked "parallel"
    # (shards over v7x's 2 TensorCores) and stream x per time-chunk; at B=2,
    # T=8 a single whole-problem VMEM block is optimal.
    return pl.pallas_call(
        kernel,
        out_shape=jax.ShapeDtypeStruct((B, O), jnp.float32),
        in_specs=[vmem] * 6,
        out_specs=vmem,
        compiler_params=pltpu.CompilerParams(vmem_limit_bytes=16 * 1024 * 1024),
    )(x2d, w_in, b_in, w_hh_f, w_out, b_out)


def bilstm_reference(tokens, params):
    """Pure-JAX reference with the same numerics (bf16 matmul operands, f32 math)."""
    x = params["embedding"][tokens.T].astype(jnp.bfloat16)               # (T, B, E)
    T, B, _ = x.shape
    H = params["w_hh_f"].shape[0]

    def cell(xt, h, c, wih, whh, b):
        gates = (jnp.dot(xt, wih.astype(jnp.bfloat16),
                         preferred_element_type=jnp.float32)
                 + jnp.dot(h.astype(jnp.bfloat16), whh.astype(jnp.bfloat16),
                           preferred_element_type=jnp.float32)
                 + b)
        i = jax.nn.sigmoid(gates[:, 0 * H:1 * H])
        f = jax.nn.sigmoid(gates[:, 1 * H:2 * H])
        g = jnp.tanh(gates[:, 2 * H:3 * H])
        o = jax.nn.sigmoid(gates[:, 3 * H:4 * H])
        c = f * c + i * g
        h = o * jnp.tanh(c)
        return h, c

    h = jnp.zeros((B, H), jnp.float32)
    c = jnp.zeros((B, H), jnp.float32)
    for t in range(T):
        h, c = cell(x[t], h, c, params["w_ih_f"], params["w_hh_f"], params["b_f"])
    hb, _ = cell(x[T - 1], jnp.zeros((B, H), jnp.float32),
                 jnp.zeros((B, H), jnp.float32),
                 params["w_ih_b"], params["w_hh_b"], params["b_b"])
    final = jnp.concatenate([h, hb], axis=-1)
    return final @ params["w_out"] + params["b_out"]


def init_params(key, vocab=50, embed_size=32, hidden_size=64, out_features=2):
    H = hidden_size // 2                  # per-direction hidden (PyTorch: hidden_size // 2)
    ks = jax.random.split(key, 10)
    bound = 1.0 / jnp.sqrt(jnp.float32(H))
    u = lambda kk, shape: jax.random.uniform(kk, shape, jnp.float32, -bound, bound)
    return {
        "embedding": jax.random.normal(ks[0], (vocab, embed_size), jnp.float32),
        # biases combine PyTorch's b_ih + b_hh into one (1, 4H) term.
        "w_ih_f": u(ks[1], (embed_size, 4 * H)),
        "w_hh_f": u(ks[2], (H, 4 * H)),
        "b_f":    u(ks[3], (1, 4 * H)),
        "w_ih_b": u(ks[4], (embed_size, 4 * H)),
        "w_hh_b": u(ks[5], (H, 4 * H)),   # unused by the kernel (zero initial state), kept for the reference
        "b_b":    u(ks[6], (1, 4 * H)),
        "w_out":  u(ks[7], (hidden_size, out_features)),
        "b_out":  u(ks[8], (1, out_features)),
    }


if __name__ == "__main__":
    key = jax.random.PRNGKey(0)
    k_tok, k_par = jax.random.split(key)

    B, T, VOCAB = 2, 8, 50
    EMBED, HIDDEN, OUT = 32, 64, 2

    params = init_params(k_par, vocab=VOCAB, embed_size=EMBED,
                         hidden_size=HIDDEN, out_features=OUT)
    tokens = jax.random.randint(k_tok, (B, T), 0, VOCAB, dtype=jnp.int32)

    y = jax.block_until_ready(bilstm_forward(tokens, params))
    y_ref = jax.block_until_ready(bilstm_reference(tokens, params))

    assert y.shape == (B, OUT)
    assert jnp.allclose(y, y_ref, atol=5e-3, rtol=5e-3), (y, y_ref)

    print("KERNEL_OK")
</pallas_src>

<mosaic_0001>
module attributes {stable_mosaic.version = 11 : i64} {
  func.func @kernel(%arg0: memref<64x32xbf16, #tpu.memory_space<vmem>>, %arg1: memref<32x256xbf16, #tpu.memory_space<vmem>>, %arg2: memref<1x256xf32, #tpu.memory_space<vmem>>, %arg3: memref<32x128xbf16, #tpu.memory_space<vmem>>, %arg4: memref<64x2xf32, #tpu.memory_space<vmem>>, %arg5: memref<1x2xf32, #tpu.memory_space<vmem>>, %arg6: memref<2x2xf32, #tpu.memory_space<vmem>>) attributes {dimension_semantics = [], scalar_prefetch = 0 : i64, scratch_operands = 0 : i64, tpu.core_type = #tpu.core_type<tc>} {
    %c0 = arith.constant 0 : index
    %c0_0 = arith.constant 0 : index
    %0 = vector.load %arg0[%c0, %c0_0] : memref<64x32xbf16, #tpu.memory_space<vmem>>, vector<64x32xbf16>
    %c0_1 = arith.constant 0 : index
    %c0_2 = arith.constant 0 : index
    %1 = vector.load %arg1[%c0_1, %c0_2] : memref<32x256xbf16, #tpu.memory_space<vmem>>, vector<32x256xbf16>
    %cst = arith.constant dense<0.000000e+00> : vector<64x256xf32>
    %2 = tpu.matmul %0, %1, %cst {dimension_numbers = #tpu.dot_dimension_numbers<[1], [0], [0], [1], [0, 0, 1, 1], [], []>} : vector<64x32xbf16>, vector<32x256xbf16>, vector<64x256xf32> -> vector<64x256xf32>
    %c0_3 = arith.constant 0 : index
    %c0_4 = arith.constant 0 : index
    %3 = vector.load %arg2[%c0_3, %c0_4] : memref<1x256xf32, #tpu.memory_space<vmem>>, vector<1x256xf32>
    %4 = vector.broadcast %3 : vector<1x256xf32> to vector<64x256xf32>
    %5 = arith.addf %2, %4 : vector<64x256xf32>
    %6 = vector.extract_strided_slice %5 {offsets = [56, 128], sizes = [8, 128], strides = [1, 1]} : vector<64x256xf32> to vector<8x128xf32>
    %7 = vector.extract_strided_slice %6 {offsets = [0, 0], sizes = [8, 32], strides = [1, 1]} : vector<8x128xf32> to vector<8x32xf32>
    %8 = arith.negf %7 : vector<8x32xf32>
    %9 = math.exp %8 : vector<8x32xf32>
    %cst_5 = arith.constant 1.000000e+00 : f32
    %10 = vector.broadcast %cst_5 : f32 to vector<8x32xf32>
    %11 = arith.addf %10, %9 : vector<8x32xf32>
    %12 = arith.divf %10, %11 : vector<8x32xf32>
    %13 = vector.extract_strided_slice %6 {offsets = [0, 64], sizes = [8, 32], strides = [1, 1]} : vector<8x128xf32> to vector<8x32xf32>
    %14 = math.tanh %13 : vector<8x32xf32>
    %15 = arith.mulf %12, %14 : vector<8x32xf32>
    %16 = vector.extract_strided_slice %6 {offsets = [0, 96], sizes = [8, 32], strides = [1, 1]} : vector<8x128xf32> to vector<8x32xf32>
    %17 = arith.negf %16 : vector<8x32xf32>
    %18 = math.exp %17 : vector<8x32xf32>
    %cst_6 = arith.constant 1.000000e+00 : f32
    %19 = vector.broadcast %cst_6 : f32 to vector<8x32xf32>
    %20 = arith.addf %19, %18 : vector<8x32xf32>
    %21 = arith.divf %19, %20 : vector<8x32xf32>
    %22 = math.tanh %15 : vector<8x32xf32>
    %23 = arith.mulf %21, %22 : vector<8x32xf32>
    %c0_7 = arith.constant 0 : index
    %c0_8 = arith.constant 0 : index
    %24 = vector.load %arg3[%c0_7, %c0_8] : memref<32x128xbf16, #tpu.memory_space<vmem>>, vector<32x128xbf16>
    %cst_9 = arith.constant 0.000000e+00 : f32
    %25 = vector.broadcast %cst_9 : f32 to vector<8x32xf32>
    %cst_10 = arith.constant 0.000000e+00 : f32
    %26 = vector.broadcast %cst_10 : f32 to vector<8x32xf32>
    %27 = vector.extract_strided_slice %5 {offsets = [0, 0], sizes = [8, 128], strides = [1, 1]} : vector<64x256xf32> to vector<8x128xf32>
    %28 = arith.truncf %25 : vector<8x32xf32> to vector<8x32xbf16>
    %cst_11 = arith.constant dense<0.000000e+00> : vector<8x128xf32>
    %29 = tpu.matmul %28, %24, %cst_11 {dimension_numbers = #tpu.dot_dimension_numbers<[1], [0], [0], [1], [0, 0, 1, 1], [], []>} : vector<8x32xbf16>, vector<32x128xbf16>, vector<8x128xf32> -> vector<8x128xf32>
    %30 = arith.addf %27, %29 : vector<8x128xf32>
    %31 = vector.extract_strided_slice %30 {offsets = [0, 0], sizes = [8, 32], strides = [1, 1]} : vector<8x128xf32> to vector<8x32xf32>
    %32 = arith.negf %31 : vector<8x32xf32>
    %33 = math.exp %32 : vector<8x32xf32>
    %cst_12 = arith.constant 1.000000e+00 : f32
    %34 = vector.broadcast %cst_12 : f32 to vector<8x32xf32>
    %35 = arith.addf %34, %33 : vector<8x32xf32>
    %36 = arith.divf %34, %35 : vector<8x32xf32>
    %37 = vector.extract_strided_slice %30 {offsets = [0, 32], sizes = [8, 32], strides = [1, 1]} : vector<8x128xf32> to vector<8x32xf32>
    %38 = arith.negf %37 : vector<8x32xf32>
    %39 = math.exp %38 : vector<8x32xf32>
    %cst_13 = arith.constant 1.000000e+00 : f32
    %40 = vector.broadcast %cst_13 : f32 to vector<8x32xf32>
    %41 = arith.addf %40, %39 : vector<8x32xf32>
    %42 = arith.divf %40, %41 : vector<8x32xf32>
    %43 = vector.extract_strided_slice %30 {offsets = [0, 64], sizes = [8, 32], strides = [1, 1]} : vector<8x128xf32> to vector<8x32xf32>
    %44 = math.tanh %43 : vector<8x32xf32>
    %45 = vector.extract_strided_slice %30 {offsets = [0, 96], sizes = [8, 32], strides = [1, 1]} : vector<8x128xf32> to vector<8x32xf32>
    %46 = arith.negf %45 : vector<8x32xf32>
    %47 = math.exp %46 : vector<8x32xf32>
    %cst_14 = arith.constant 1.000000e+00 : f32
    %48 = vector.broadcast %cst_14 : f32 to vector<8x32xf32>
    %49 = arith.addf %48, %47 : vector<8x32xf32>
    %50 = arith.divf %48, %49 : vector<8x32xf32>
    %51 = arith.mulf %42, %26 : vector<8x32xf32>
    %52 = arith.mulf %36, %44 : vector<8x32xf32>
    %53 = arith.addf %51, %52 : vector<8x32xf32>
    %54 = math.tanh %53 : vector<8x32xf32>
    %55 = arith.mulf %50, %54 : vector<8x32xf32>
    %56 = vector.extract_strided_slice %5 {offsets = [8, 0], sizes = [8, 128], strides = [1, 1]} : vector<64x256xf32> to vector<8x128xf32>
    %57 = arith.truncf %55 : vector<8x32xf32> to vector<8x32xbf16>
    %cst_15 = arith.constant dense<0.000000e+00> : vector<8x128xf32>
    %58 = tpu.matmul %57, %24, %cst_15 {dimension_numbers = #tpu.dot_dimension_numbers<[1], [0], [0], [1], [0, 0, 1, 1], [], []>} : vector<8x32xbf16>, vector<32x128xbf16>, vector<8x128xf32> -> vector<8x128xf32>
    %59 = arith.addf %56, %58 : vector<8x128xf32>
    %60 = vector.extract_strided_slice %59 {offsets = [0, 0], sizes = [8, 32], strides = [1, 1]} : vector<8x128xf32> to vector<8x32xf32>
    %61 = arith.negf %60 : vector<8x32xf32>
    %62 = math.exp %61 : vector<8x32xf32>
    %cst_16 = arith.constant 1.000000e+00 : f32
    %63 = vector.broadcast %cst_16 : f32 to vector<8x32xf32>
    %64 = arith.addf %63, %62 : vector<8x32xf32>
    %65 = arith.divf %63, %64 : vector<8x32xf32>
    %66 = vector.extract_strided_slice %59 {offsets = [0, 32], sizes = [8, 32], strides = [1, 1]} : vector<8x128xf32> to vector<8x32xf32>
    %67 = arith.negf %66 : vector<8x32xf32>
    %68 = math.exp %67 : vector<8x32xf32>
    %cst_17 = arith.constant 1.000000e+00 : f32
    %69 = vector.broadcast %cst_17 : f32 to vector<8x32xf32>
    %70 = arith.addf %69, %68 : vector<8x32xf32>
    %71 = arith.divf %69, %70 : vector<8x32xf32>
    %72 = vector.extract_strided_slice %59 {offsets = [0, 64], sizes = [8, 32], strides = [1, 1]} : vector<8x128xf32> to vector<8x32xf32>
    %73 = math.tanh %72 : vector<8x32xf32>
    %74 = vector.extract_strided_slice %59 {offsets = [0, 96], sizes = [8, 32], strides = [1, 1]} : vector<8x128xf32> to vector<8x32xf32>
    %75 = arith.negf %74 : vector<8x32xf32>
    %76 = math.exp %75 : vector<8x32xf32>
    %cst_18 = arith.constant 1.000000e+00 : f32
    %77 = vector.broadcast %cst_18 : f32 to vector<8x32xf32>
    %78 = arith.addf %77, %76 : vector<8x32xf32>
    %79 = arith.divf %77, %78 : vector<8x32xf32>
    %80 = arith.mulf %71, %53 : vector<8x32xf32>
    %81 = arith.mulf %65, %73 : vector<8x32xf32>
    %82 = arith.addf %80, %81 : vector<8x32xf32>
    %83 = math.tanh %82 : vector<8x32xf32>
    %84 = arith.mulf %79, %83 : vector<8x32xf32>
    %85 = vector.extract_strided_slice %5 {offsets = [16, 0], sizes = [8, 128], strides = [1, 1]} : vector<64x256xf32> to vector<8x128xf32>
    %86 = arith.truncf %84 : vector<8x32xf32> to vector<8x32xbf16>
    %cst_19 = arith.constant dense<0.000000e+00> : vector<8x128xf32>
    %87 = tpu.matmul %86, %24, %cst_19 {dimension_numbers = #tpu.dot_dimension_numbers<[1], [0], [0], [1], [0, 0, 1, 1], [], []>} : vector<8x32xbf16>, vector<32x128xbf16>, vector<8x128xf32> -> vector<8x128xf32>
    %88 = arith.addf %85, %87 : vector<8x128xf32>
    %89 = vector.extract_strided_slice %88 {offsets = [0, 0], sizes = [8, 32], strides = [1, 1]} : vector<8x128xf32> to vector<8x32xf32>
    %90 = arith.negf %89 : vector<8x32xf32>
    %91 = math.exp %90 : vector<8x32xf32>
    %cst_20 = arith.constant 1.000000e+00 : f32
    %92 = vector.broadcast %cst_20 : f32 to vector<8x32xf32>
    %93 = arith.addf %92, %91 : vector<8x32xf32>
    %94 = arith.divf %92, %93 : vector<8x32xf32>
    %95 = vector.extract_strided_slice %88 {offsets = [0, 32], sizes = [8, 32], strides = [1, 1]} : vector<8x128xf32> to vector<8x32xf32>
    %96 = arith.negf %95 : vector<8x32xf32>
    %97 = math.exp %96 : vector<8x32xf32>
    %cst_21 = arith.constant 1.000000e+00 : f32
    %98 = vector.broadcast %cst_21 : f32 to vector<8x32xf32>
    %99 = arith.addf %98, %97 : vector<8x32xf32>
    %100 = arith.divf %98, %99 : vector<8x32xf32>
    %101 = vector.extract_strided_slice %88 {offsets = [0, 64], sizes = [8, 32], strides = [1, 1]} : vector<8x128xf32> to vector<8x32xf32>
    %102 = math.tanh %101 : vector<8x32xf32>
    %103 = vector.extract_strided_slice %88 {offsets = [0, 96], sizes = [8, 32], strides = [1, 1]} : vector<8x128xf32> to vector<8x32xf32>
    %104 = arith.negf %103 : vector<8x32xf32>
    %105 = math.exp %104 : vector<8x32xf32>
    %cst_22 = arith.constant 1.000000e+00 : f32
    %106 = vector.broadcast %cst_22 : f32 to vector<8x32xf32>
    %107 = arith.addf %106, %105 : vector<8x32xf32>
    %108 = arith.divf %106, %107 : vector<8x32xf32>
    %109 = arith.mulf %100, %82 : vector<8x32xf32>
    %110 = arith.mulf %94, %102 : vector<8x32xf32>
    %111 = arith.addf %109, %110 : vector<8x32xf32>
    %112 = math.tanh %111 : vector<8x32xf32>
    %113 = arith.mulf %108, %112 : vector<8x32xf32>
    %114 = vector.extract_strided_slice %5 {offsets = [24, 0], sizes = [8, 128], strides = [1, 1]} : vector<64x256xf32> to vector<8x128xf32>
    %115 = arith.truncf %113 : vector<8x32xf32> to vector<8x32xbf16>
    %cst_23 = arith.constant dense<0.000000e+00> : vector<8x128xf32>
    %116 = tpu.matmul %115, %24, %cst_23 {dimension_numbers = #tpu.dot_dimension_numbers<[1], [0], [0], [1], [0, 0, 1, 1], [], []>} : vector<8x32xbf16>, vector<32x128xbf16>, vector<8x128xf32> -> vector<8x128xf32>
    %117 = arith.addf %114, %116 : vector<8x128xf32>
    %118 = vector.extract_strided_slice %117 {offsets = [0, 0], sizes = [8, 32], strides = [1, 1]} : vector<8x128xf32> to vector<8x32xf32>
    %119 = arith.negf %118 : vector<8x32xf32>
    %120 = math.exp %119 : vector<8x32xf32>
    %cst_24 = arith.constant 1.000000e+00 : f32
    %121 = vector.broadcast %cst_24 : f32 to vector<8x32xf32>
    %122 = arith.addf %121, %120 : vector<8x32xf32>
    %123 = arith.divf %121, %122 : vector<8x32xf32>
    %124 = vector.extract_strided_slice %117 {offsets = [0, 32], sizes = [8, 32], strides = [1, 1]} : vector<8x128xf32> to vector<8x32xf32>
    %125 = arith.negf %124 : vector<8x32xf32>
    %126 = math.exp %125 : vector<8x32xf32>
    %cst_25 = arith.constant 1.000000e+00 : f32
    %127 = vector.broadcast %cst_25 : f32 to vector<8x32xf32>
    %128 = arith.addf %127, %126 : vector<8x32xf32>
    %129 = arith.divf %127, %128 : vector<8x32xf32>
    %130 = vector.extract_strided_slice %117 {offsets = [0, 64], sizes = [8, 32], strides = [1, 1]} : vector<8x128xf32> to vector<8x32xf32>
    %131 = math.tanh %130 : vector<8x32xf32>
    %132 = vector.extract_strided_slice %117 {offsets = [0, 96], sizes = [8, 32], strides = [1, 1]} : vector<8x128xf32> to vector<8x32xf32>
    %133 = arith.negf %132 : vector<8x32xf32>
    %134 = math.exp %133 : vector<8x32xf32>
    %cst_26 = arith.constant 1.000000e+00 : f32
    %135 = vector.broadcast %cst_26 : f32 to vector<8x32xf32>
    %136 = arith.addf %135, %134 : vector<8x32xf32>
    %137 = arith.divf %135, %136 : vector<8x32xf32>
    %138 = arith.mulf %129, %111 : vector<8x32xf32>
    %139 = arith.mulf %123, %131 : vector<8x32xf32>
    %140 = arith.addf %138, %139 : vector<8x32xf32>
    %141 = math.tanh %140 : vector<8x32xf32>
    %142 = arith.mulf %137, %141 : vector<8x32xf32>
    %143 = vector.extract_strided_slice %5 {offsets = [32, 0], sizes = [8, 128], strides = [1, 1]} : vector<64x256xf32> to vector<8x128xf32>
    %144 = arith.truncf %142 : vector<8x32xf32> to vector<8x32xbf16>
    %cst_27 = arith.constant dense<0.000000e+00> : vector<8x128xf32>
    %145 = tpu.matmul %144, %24, %cst_27 {dimension_numbers = #tpu.dot_dimension_numbers<[1], [0], [0], [1], [0, 0, 1, 1], [], []>} : vector<8x32xbf16>, vector<32x128xbf16>, vector<8x128xf32> -> vector<8x128xf32>
    %146 = arith.addf %143, %145 : vector<8x128xf32>
    %147 = vector.extract_strided_slice %146 {offsets = [0, 0], sizes = [8, 32], strides = [1, 1]} : vector<8x128xf32> to vector<8x32xf32>
    %148 = arith.negf %147 : vector<8x32xf32>
    %149 = math.exp %148 : vector<8x32xf32>
    %cst_28 = arith.constant 1.000000e+00 : f32
    %150 = vector.broadcast %cst_28 : f32 to vector<8x32xf32>
    %151 = arith.addf %150, %149 : vector<8x32xf32>
    %152 = arith.divf %150, %151 : vector<8x32xf32>
    %153 = vector.extract_strided_slice %146 {offsets = [0, 32], sizes = [8, 32], strides = [1, 1]} : vector<8x128xf32> to vector<8x32xf32>
    %154 = arith.negf %153 : vector<8x32xf32>
    %155 = math.exp %154 : vector<8x32xf32>
    %cst_29 = arith.constant 1.000000e+00 : f32
    %156 = vector.broadcast %cst_29 : f32 to vector<8x32xf32>
    %157 = arith.addf %156, %155 : vector<8x32xf32>
    %158 = arith.divf %156, %157 : vector<8x32xf32>
    %159 = vector.extract_strided_slice %146 {offsets = [0, 64], sizes = [8, 32], strides = [1, 1]} : vector<8x128xf32> to vector<8x32xf32>
    %160 = math.tanh %159 : vector<8x32xf32>
    %161 = vector.extract_strided_slice %146 {offsets = [0, 96], sizes = [8, 32], strides = [1, 1]} : vector<8x128xf32> to vector<8x32xf32>
    %162 = arith.negf %161 : vector<8x32xf32>
    %163 = math.exp %162 : vector<8x32xf32>
    %cst_30 = arith.constant 1.000000e+00 : f32
    %164 = vector.broadcast %cst_30 : f32 to vector<8x32xf32>
    %165 = arith.addf %164, %163 : vector<8x32xf32>
    %166 = arith.divf %164, %165 : vector<8x32xf32>
    %167 = arith.mulf %158, %140 : vector<8x32xf32>
    %168 = arith.mulf %152, %160 : vector<8x32xf32>
    %169 = arith.addf %167, %168 : vector<8x32xf32>
    %170 = math.tanh %169 : vector<8x32xf32>
    %171 = arith.mulf %166, %170 : vector<8x32xf32>
    %172 = vector.extract_strided_slice %5 {offsets = [40, 0], sizes = [8, 128], strides = [1, 1]} : vector<64x256xf32> to vector<8x128xf32>
    %173 = arith.truncf %171 : vector<8x32xf32> to vector<8x32xbf16>
    %cst_31 = arith.constant dense<0.000000e+00> : vector<8x128xf32>
    %174 = tpu.matmul %173, %24, %cst_31 {dimension_numbers = #tpu.dot_dimension_numbers<[1], [0], [0], [1], [0, 0, 1, 1], [], []>} : vector<8x32xbf16>, vector<32x128xbf16>, vector<8x128xf32> -> vector<8x128xf32>
    %175 = arith.addf %172, %174 : vector<8x128xf32>
    %176 = vector.extract_strided_slice %175 {offsets = [0, 0], sizes = [8, 32], strides = [1, 1]} : vector<8x128xf32> to vector<8x32xf32>
    %177 = arith.negf %176 : vector<8x32xf32>
    %178 = math.exp %177 : vector<8x32xf32>
    %cst_32 = arith.constant 1.000000e+00 : f32
    %179 = vector.broadcast %cst_32 : f32 to vector<8x32xf32>
    %180 = arith.addf %179, %178 : vector<8x32xf32>
    %181 = arith.divf %179, %180 : vector<8x32xf32>
    %182 = vector.extract_strided_slice %175 {offsets = [0, 32], sizes = [8, 32], strides = [1, 1]} : vector<8x128xf32> to vector<8x32xf32>
    %183 = arith.negf %182 : vector<8x32xf32>
    %184 = math.exp %183 : vector<8x32xf32>
    %cst_33 = arith.constant 1.000000e+00 : f32
    %185 = vector.broadcast %cst_33 : f32 to vector<8x32xf32>
    %186 = arith.addf %185, %184 : vector<8x32xf32>
    %187 = arith.divf %185, %186 : vector<8x32xf32>
    %188 = vector.extract_strided_slice %175 {offsets = [0, 64], sizes = [8, 32], strides = [1, 1]} : vector<8x128xf32> to vector<8x32xf32>
    %189 = math.tanh %188 : vector<8x32xf32>
    %190 = vector.extract_strided_slice %175 {offsets = [0, 96], sizes = [8, 32], strides = [1, 1]} : vector<8x128xf32> to vector<8x32xf32>
    %191 = arith.negf %190 : vector<8x32xf32>
    %192 = math.exp %191 : vector<8x32xf32>
    %cst_34 = arith.constant 1.000000e+00 : f32
    %193 = vector.broadcast %cst_34 : f32 to vector<8x32xf32>
    %194 = arith.addf %193, %192 : vector<8x32xf32>
    %195 = arith.divf %193, %194 : vector<8x32xf32>
    %196 = arith.mulf %187, %169 : vector<8x32xf32>
    %197 = arith.mulf %181, %189 : vector<8x32xf32>
    %198 = arith.addf %196, %197 : vector<8x32xf32>
    %199 = math.tanh %198 : vector<8x32xf32>
    %200 = arith.mulf %195, %199 : vector<8x32xf32>
    %201 = vector.extract_strided_slice %5 {offsets = [48, 0], sizes = [8, 128], strides = [1, 1]} : vector<64x256xf32> to vector<8x128xf32>
    %202 = arith.truncf %200 : vector<8x32xf32> to vector<8x32xbf16>
    %cst_35 = arith.constant dense<0.000000e+00> : vector<8x128xf32>
    %203 = tpu.matmul %202, %24, %cst_35 {dimension_numbers = #tpu.dot_dimension_numbers<[1], [0], [0], [1], [0, 0, 1, 1], [], []>} : vector<8x32xbf16>, vector<32x128xbf16>, vector<8x128xf32> -> vector<8x128xf32>
    %204 = arith.addf %201, %203 : vector<8x128xf32>
    %205 = vector.extract_strided_slice %204 {offsets = [0, 0], sizes = [8, 32], strides = [1, 1]} : vector<8x128xf32> to vector<8x32xf32>
    %206 = arith.negf %205 : vector<8x32xf32>
    %207 = math.exp %206 : vector<8x32xf32>
    %cst_36 = arith.constant 1.000000e+00 : f32
    %208 = vector.broadcast %cst_36 : f32 to vector<8x32xf32>
    %209 = arith.addf %208, %207 : vector<8x32xf32>
    %210 = arith.divf %208, %209 : vector<8x32xf32>
    %211 = vector.extract_strided_slice %204 {offsets = [0, 32], sizes = [8, 32], strides = [1, 1]} : vector<8x128xf32> to vector<8x32xf32>
    %212 = arith.negf %211 : vector<8x32xf32>
    %213 = math.exp %212 : vector<8x32xf32>
    %cst_37 = arith.constant 1.000000e+00 : f32
    %214 = vector.broadcast %cst_37 : f32 to vector<8x32xf32>
    %215 = arith.addf %214, %213 : vector<8x32xf32>
    %216 = arith.divf %214, %215 : vector<8x32xf32>
    %217 = vector.extract_strided_slice %204 {offsets = [0, 64], sizes = [8, 32], strides = [1, 1]} : vector<8x128xf32> to vector<8x32xf32>
    %218 = math.tanh %217 : vector<8x32xf32>
    %219 = vector.extract_strided_slice %204 {offsets = [0, 96], sizes = [8, 32], strides = [1, 1]} : vector<8x128xf32> to vector<8x32xf32>
    %220 = arith.negf %219 : vector<8x32xf32>
    %221 = math.exp %220 : vector<8x32xf32>
    %cst_38 = arith.constant 1.000000e+00 : f32
    %222 = vector.broadcast %cst_38 : f32 to vector<8x32xf32>
    %223 = arith.addf %222, %221 : vector<8x32xf32>
    %224 = arith.divf %222, %223 : vector<8x32xf32>
    %225 = arith.mulf %216, %198 : vector<8x32xf32>
    %226 = arith.mulf %210, %218 : vector<8x32xf32>
    %227 = arith.addf %225, %226 : vector<8x32xf32>
    %228 = math.tanh %227 : vector<8x32xf32>
    %229 = arith.mulf %224, %228 : vector<8x32xf32>
    %230 = vector.extract_strided_slice %5 {offsets = [56, 0], sizes = [8, 128], strides = [1, 1]} : vector<64x256xf32> to vector<8x128xf32>
    %231 = arith.truncf %229 : vector<8x32xf32> to vector<8x32xbf16>
    %cst_39 = arith.constant dense<0.000000e+00> : vector<8x128xf32>
    %232 = tpu.matmul %231, %24, %cst_39 {dimension_numbers = #tpu.dot_dimension_numbers<[1], [0], [0], [1], [0, 0, 1, 1], [], []>} : vector<8x32xbf16>, vector<32x128xbf16>, vector<8x128xf32> -> vector<8x128xf32>
    %233 = arith.addf %230, %232 : vector<8x128xf32>
    %234 = vector.extract_strided_slice %233 {offsets = [0, 0], sizes = [8, 32], strides = [1, 1]} : vector<8x128xf32> to vector<8x32xf32>
    %235 = arith.negf %234 : vector<8x32xf32>
    %236 = math.exp %235 : vector<8x32xf32>
    %cst_40 = arith.constant 1.000000e+00 : f32
    %237 = vector.broadcast %cst_40 : f32 to vector<8x32xf32>
    %238 = arith.addf %237, %236 : vector<8x32xf32>
    %239 = arith.divf %237, %238 : vector<8x32xf32>
    %240 = vector.extract_strided_slice %233 {offsets = [0, 32], sizes = [8, 32], strides = [1, 1]} : vector<8x128xf32> to vector<8x32xf32>
    %241 = arith.negf %240 : vector<8x32xf32>
    %242 = math.exp %241 : vector<8x32xf32>
    %cst_41 = arith.constant 1.000000e+00 : f32
    %243 = vector.broadcast %cst_41 : f32 to vector<8x32xf32>
    %244 = arith.addf %243, %242 : vector<8x32xf32>
    %245 = arith.divf %243, %244 : vector<8x32xf32>
    %246 = vector.extract_strided_slice %233 {offsets = [0, 64], sizes = [8, 32], strides = [1, 1]} : vector<8x128xf32> to vector<8x32xf32>
    %247 = math.tanh %246 : vector<8x32xf32>
    %248 = vector.extract_strided_slice %233 {offsets = [0, 96], sizes = [8, 32], strides = [1, 1]} : vector<8x128xf32> to vector<8x32xf32>
    %249 = arith.negf %248 : vector<8x32xf32>
    %250 = math.exp %249 : vector<8x32xf32>
    %cst_42 = arith.constant 1.000000e+00 : f32
    %251 = vector.broadcast %cst_42 : f32 to vector<8x32xf32>
    %252 = arith.addf %251, %250 : vector<8x32xf32>
    %253 = arith.divf %251, %252 : vector<8x32xf32>
    %254 = arith.mulf %245, %227 : vector<8x32xf32>
    %255 = arith.mulf %239, %247 : vector<8x32xf32>
    %256 = arith.addf %254, %255 : vector<8x32xf32>
    %257 = math.tanh %256 : vector<8x32xf32>
    %258 = arith.mulf %253, %257 : vector<8x32xf32>
    %259 = tpu.concatenate %258, %23 in 1 : vector<8x32xf32>, vector<8x32xf32> -> vector<8x64xf32>
    %c0_43 = arith.constant 0 : index
    %c0_44 = arith.constant 0 : index
    %260 = vector.load %arg4[%c0_43, %c0_44] : memref<64x2xf32, #tpu.memory_space<vmem>>, vector<64x2xf32>
    %cst_45 = arith.constant dense<0.000000e+00> : vector<8x2xf32>
    %261 = tpu.matmul %259, %260, %cst_45 {dimension_numbers = #tpu.dot_dimension_numbers<[1], [0], [0], [1], [0, 0, 1, 1], [], []>} : vector<8x64xf32>, vector<64x2xf32>, vector<8x2xf32> -> vector<8x2xf32>
    %c0_46 = arith.constant 0 : index
    %c0_47 = arith.constant 0 : index
    %262 = vector.load %arg5[%c0_46, %c0_47] : memref<1x2xf32, #tpu.memory_space<vmem>>, vector<1x2xf32>
    %263 = vector.broadcast %262 : vector<1x2xf32> to vector<8x2xf32>
    %264 = arith.addf %261, %263 : vector<8x2xf32>
    %265 = vector.extract_strided_slice %264 {offsets = [0, 0], sizes = [2, 2], strides = [1, 1]} : vector<8x2xf32> to vector<2x2xf32>
    %c0_48 = arith.constant 0 : index
    %c0_49 = arith.constant 0 : index
    %266 = vector.load %arg6[%c0_48, %c0_49] : memref<2x2xf32, #tpu.memory_space<vmem>>, vector<2x2xf32>
    tpu.vector_store %arg6[%c0_48, %c0_49], %265 {strides = array<i32>} : memref<2x2xf32, #tpu.memory_space<vmem>>, vector<2x2xf32>,
    return
  }
}

</mosaic_0001>

<llo_original>
// kernel: tpu_custom_call.1
$region0: #{tpu_custom_call.1}
  #allocation0 [shape = 'u32[]', space=smem, size = 0x4, offset = 0x4, fixed_abs, tag = 'smem constant byte address 0x4 - core index']
  #allocation1 [shape = 'u32[144,128]{1,0:T(1,128)}', space=vmem, size = 0x12000, scoped, tag = 'internal scratch']
  %s0 = inlined_call_operand.vmem [shape: bf16[64,32], index: 0, kind: input, shape index: {}]
  %s1 = inlined_call_operand.vmem [shape: bf16[32,256], index: 1, kind: input, shape index: {}]
  %s2 = inlined_call_operand.vmem [shape: f32[1,256], index: 2, kind: input, shape index: {}]
  %s3 = inlined_call_operand.vmem [shape: bf16[32,128], index: 3, kind: input, shape index: {}]
  %s4 = inlined_call_operand.vmem [shape: f32[64,2], index: 4, kind: input, shape index: {}]
  %s5 = inlined_call_operand.vmem [shape: f32[1,2], index: 5, kind: input, shape index: {}]
  %s6 = inlined_call_operand.hbm [shape: f32[2,2], index: 6, kind: output, shape index: {}]
  %s7 = sld [smem:[#allocation0]]
  $region34: #{tpu_custom_call.1} parent=0
    _
  %s9 = ssub.s32 1, %s7
  %s10 = scalar_select 0, %s9, %s7
  $region1: #{tpu_custom_call.1} parent=0
    #allocation2 [shape = 'u8[1024]{0}', space=vmem, size = 0x400, scoped, tag = 'output window, operand 0, single buffered']
    #allocation3 [shape = 's32[1]{0}', space=sflag, size = 0x4, scoped, tag = 'scoped memory for tpu_custom_call.1']
    %11 = vsyncpa [#allocation3], 0
    // Predicated region
    $region2: #{tpu_custom_call.1} parent=1 // pred_check
      _
    $region3: #{tpu_custom_call.1} parent=1 // pred_check_branch
      %13 = sbr.rel (0) target = $region5
    $region4: #{tpu_custom_call.1} parent=1 // pred_region
      _
    $region5: #{tpu_custom_call.1} parent=1 // pred_fallthru
      _
    // Predicated region
    $region6: #{tpu_custom_call.1} parent=1 // pred_check
      _
    $region7: #{tpu_custom_call.1} parent=1 // pred_check_branch
      %15 = sbr.rel (0) target = $region9
    $region8: #{tpu_custom_call.1} parent=1 // pred_region
      _
    $region9: #{tpu_custom_call.1} parent=1 // pred_fallthru
      _
    // Predicated region
    $region10: #{tpu_custom_call.1} parent=1 // pred_check
      _
    $region11: #{tpu_custom_call.1} parent=1 // pred_check_branch
      %17 = sbr.rel (0) target = $region13
    $region12: #{tpu_custom_call.1} parent=1 // pred_region
      _
    $region13: #{tpu_custom_call.1} parent=1 // pred_fallthru
      _
    // Predicated region
    $region14: #{tpu_custom_call.1} parent=1 // pred_check
      _
    $region15: #{tpu_custom_call.1} parent=1 // pred_check_branch
      %19 = sbr.rel (0) target = $region17
    $region16: #{tpu_custom_call.1} parent=1 // pred_region
      _
    $region17: #{tpu_custom_call.1} parent=1 // pred_fallthru
      _
    // Predicated region
    $region18: #{tpu_custom_call.1} parent=1 // pred_check
      _
    $region19: #{tpu_custom_call.1} parent=1 // pred_check_branch
      %21 = sbr.rel (0) target = $region21
    $region20: #{tpu_custom_call.1} parent=1 // pred_region
      _
    $region21: #{tpu_custom_call.1} parent=1 // pred_fallthru
      _
    // Predicated region
    $region22: #{tpu_custom_call.1} parent=1 // pred_check
      _
    $region23: #{tpu_custom_call.1} parent=1 // pred_check_branch
      %23 = sbr.rel (0) target = $region25
    $region24: #{tpu_custom_call.1} parent=1 // pred_region
      _
    $region25: #{tpu_custom_call.1} parent=1 // pred_fallthru
      _
    %v25 = vld [vmem:[%s0] sm:$0xf]
    %v26 = vld [vmem:[%s0 + $0x4] sm:$0xf]
    %v27 = vld [vmem:[%s0 + $0x8] sm:$0xf]
    %v28 = vld [vmem:[%s0 + $0xc] sm:$0xf]
    %v29 = vld [vmem:[%s0 + $0x10] sm:$0xf]
    %v30 = vld [vmem:[%s0 + $0x14] sm:$0xf]
    %v31 = vld [vmem:[%s0 + $0x18] sm:$0xf]
    %v32 = vld [vmem:[%s0 + $0x1c] sm:$0xf]
    %v33 = vld [vmem:[%s1] sm:$0xff]
    %v34 = vld [vmem:[%s1 + $0x8] sm:$0xff]
    %v35 = vld [vmem:[%s1 + $0x10] sm:$0xff]
    %v36 = vld [vmem:[%s1 + $0x18] sm:$0xff]
    %v37 = vld [vmem:[%s2] sm:$0x3]
    %v39 = vlaneseq
    %v40 = vshrl.u32 %v39, 7
    %v41 = vsub.s32 0, %v40
    %v42 = vrot.slane %v37, %v41
    %v43 = vlaneseq
    %v44 = vshrl.u32 %v43, 7
    %v45 = vsub.s32 1, %v44
    %v46 = vrot.slane %v37, %v45
    %v57 = vunpack.c.l.b16 %v25
    %v58 = vunpack.c.l.b16 %v26
    %v59 = vunpack.c.l.b16 %v27
    %v60 = vunpack.c.l.b16 %v28
    %v61 = vunpack.c.l.b16 %v29
    %v62 = vunpack.c.l.b16 %v30
    %v63 = vunpack.c.l.b16 %v31
    %v64 = vunpack.c.l.b16 %v32
    %v65 = vpack.c.b16 %v58, %v57
    %v66 = vpack.c.b16 %v60, %v59
    %v67 = vpack.c.b16 %v62, %v61
    %v68 = vpack.c.b16 %v64, %v63
    %v73 = vunpack.c.l.b16 %v33
    %v74 = vunpack.c.h.b16 %v33
    %v75 = vunpack.c.l.b16 %v34
    %v76 = vunpack.c.h.b16 %v34
    %v77 = vunpack.c.l.b16 %v35
    %v78 = vunpack.c.h.b16 %v35
    %v79 = vunpack.c.l.b16 %v36
    %v80 = vunpack.c.h.b16 %v36
    %v81 = vpack.c.b16 %v75, %v73
    %v82 = vpack.c.b16 %v76, %v74
    %v83 = vpack.c.b16 %v79, %v77
    %v84 = vpack.c.b16 %v80, %v78
    %vm89 = vcmask 261120
    %v91 = vsel %vm89, %v65, 0
    %v94 = vsel %vm89, %v66, 0
    %v97 = vsel %vm89, %v67, 0
    %v100 = vsel %vm89, %v68, 0
    %102 = vmatprep.subr.bf16.mxu0 %v82
    %103 = vmatpush1.bf16.msra.mxu0 %v81
    %104 = vmatprep.subr.bf16.mxu0 %v84
    %105 = vmatpush1.bf16.msra.mxu0 %v83
    %106 = vmatprep.subr.bf16.mxu0 0
    %107 = vmatpush1.bf16.msra.mxu0 0
    %108 = vmatprep.subr.bf16.mxu0 0
    %109 = vmatpush1.bf16.msra.mxu0 0
    %110 = vmatprep.subr.bf16.mxu0 0
    %111 = vmatpush1.bf16.msra.mxu0 0
    %112 = vmatprep.subr.bf16.mxu0 0
    %113 = vmatpush1.bf16.msra.mxu0 0
    %114 = vmatprep.subr.bf16.mxu0 0
    %115 = vmatpush1.bf16.msra.mxu0 0
    %116 = vmatprep.subr.bf16.mxu0 0
    %117 = vmatpush1.bf16.msra.mxu0 0
    %118 = vmatprep.subr.bf16.mxu0 0
    %119 = vmatpush1.bf16.msra.mxu0 0
    %120 = vmatprep.subr.bf16.mxu0 0
    %121 = vmatpush1.bf16.msra.mxu0 0
    %122 = vmatprep.subr.bf16.mxu0 0
    %123 = vmatpush1.bf16.msra.mxu0 0
    %124 = vmatprep.subr.bf16.mxu0 0
    %125 = vmatpush1.bf16.msra.mxu0 0
    %126 = vmatprep.subr.bf16.mxu0 0
    %127 = vmatpush1.bf16.msra.mxu0 0
    %128 = vmatprep.subr.bf16.mxu0 0
    %129 = vmatpush1.bf16.msra.mxu0 0
    %130 = vmatprep.subr.bf16.mxu0 0
    %131 = vmatpush1.bf16.msra.mxu0 0
    %132 = vmatprep.subr.bf16.mxu0 0
    %133 = vmatpush1.bf16.msra.mxu0 0
    %134 = vmatprep.mubr.bf16.mxu0 0
    %135 = vmatmul.mubr.bf16.gmra.mrb[0].mxu0 %v91
    %v136 = vpop.f32.mrb[0].mxu0
    %v137 = vadd.f32 %v42, %v136
    %v138 = vpop.f32.mrb[0].mxu0
    %v139 = vpop.f32.mrb[0].mxu0
    %v140 = vadd.f32 %v42, %v139
    %v141 = vpop.f32.mrb[0].mxu0
    %142 = vmatprep.mubr.bf16.mxu0 0
    %143 = vmatmul.mubr.bf16.gmra.mrb[0].mxu0 %v94
    %v144 = vpop.f32.mrb[0].mxu0
    %v145 = vadd.f32 %v42, %v144
    %v146 = vpop.f32.mrb[0].mxu0
    %v147 = vpop.f32.mrb[0].mxu0
    %v148 = vadd.f32 %v42, %v147
    %v149 = vpop.f32.mrb[0].mxu0
    %150 = vmatprep.mubr.bf16.mxu0 0
    %151 = vmatmul.mubr.bf16.gmra.mrb[0].mxu0 %v97
    %v152 = vpop.f32.mrb[0].mxu0
    %v153 = vadd.f32 %v42, %v152
    %v154 = vpop.f32.mrb[0].mxu0
    %v155 = vpop.f32.mrb[0].mxu0
    %v156 = vadd.f32 %v42, %v155
    %v157 = vpop.f32.mrb[0].mxu0
    %158 = vmatprep.mubr.bf16.mxu0 0
    %159 = vmatmul.mubr.bf16.gmra.mrb[0].mxu0 %v100
    %v160 = vpop.f32.mrb[0].mxu0
    %v161 = vadd.f32 %v42, %v160
    %v162 = vpop.f32.mrb[0].mxu0
    %v163 = vpop.f32.mrb[0].mxu0
    %v164 = vadd.f32 %v42, %v163
    %v165 = vpop.f32.mrb[0].mxu0
    %v166 = vadd.f32 %v46, %v165
    %167 = vdwg.mxu0
    %v168 = vxor.u32 %v166, 2147483648
    %v169 = vmul.f32 %v168, 1.442695
    %v170 = vpow.pop %v169
    %v171 = vadd.f32 %v170, 1.0
    %v172 = vrcp.pop %v171
    %v173 = vmul.f32 1.0, %v172
    %v174 = vtanh.pop %v166
    %176 = vrot.lane.b32.xlu0 %v174, 64
    %v177 = vpop.permute.xlu0 %176
    %v179 = vmul.f32 %v173, %v177
    %v180 = vtanh.pop %v179
    %182 = vrot.lane.b32.xlu0 %v180, 96
    %v183 = vpop.permute.xlu0 %182
    %v185 = vmul.f32 %v173, %v183
    %v186 = vld [vmem:[%s3] sm:$0xf]
    %v187 = vld [vmem:[%s3 + $0x4] sm:$0xf]
    %v188 = vld [vmem:[%s3 + $0x8] sm:$0xf]
    %v189 = vld [vmem:[%s3 + $0xc] sm:$0xf]
    %v194 = vunpack.c.l.b16 %v186
    %v195 = vunpack.c.l.b16 %v187
    %v196 = vunpack.c.l.b16 %v188
    %v197 = vunpack.c.l.b16 %v189
    %v198 = vpack.c.b16 %v195, %v194
    %v199 = vpack.c.b16 %v197, %v196
    %v203 = vsel %vm89, 0, 0
    %205 = vmatprep.subr.bf16.mxu0 0
    %206 = vmatpush1.bf16.msra.mxu0 %v198
    %207 = vmatprep.subr.bf16.mxu0 0
    %208 = vmatpush1.bf16.msra.mxu0 %v199
    %209 = vmatprep.subr.bf16.mxu0 0
    %210 = vmatpush1.bf16.msra.mxu0 0
    %211 = vmatprep.subr.bf16.mxu0 0
    %212 = vmatpush1.bf16.msra.mxu0 0
    %213 = vmatprep.subr.bf16.mxu0 0
    %214 = vmatpush1.bf16.msra.mxu0 0
    %215 = vmatprep.subr.bf16.mxu0 0
    %216 = vmatpush1.bf16.msra.mxu0 0
    %217 = vmatprep.subr.bf16.mxu0 0
    %218 = vmatpush1.bf16.msra.mxu0 0
    %219 = vmatprep.subr.bf16.mxu0 0
    %220 = vmatpush1.bf16.msra.mxu0 0
    %221 = vmatprep.subr.bf16.mxu0 0
    %222 = vmatpush1.bf16.msra.mxu0 0
    %223 = vmatprep.subr.bf16.mxu0 0
    %224 = vmatpush1.bf16.msra.mxu0 0
    %225 = vmatprep.subr.bf16.mxu0 0
    %226 = vmatpush1.bf16.msra.mxu0 0
    %227 = vmatprep.subr.bf16.mxu0 0
    %228 = vmatpush1.bf16.msra.mxu0 0
    %229 = vmatprep.subr.bf16.mxu0 0
    %230 = vmatpush1.bf16.msra.mxu0 0
    %231 = vmatprep.subr.bf16.mxu0 0
    %232 = vmatpush1.bf16.msra.mxu0 0
    %233 = vmatprep.subr.bf16.mxu0 0
    %234 = vmatpush1.bf16.msra.mxu0 0
    %235 = vmatprep.subr.bf16.mxu0 0
    %236 = vmatpush1.bf16.msra.mxu0 0
    %237 = vmatprep.mubr.bf16.mxu0 0
    %238 = vmatmul.mubr.bf16.gmra.mrb[0].mxu0 %v203
    %v239 = vpop.f32.mrb[0].mxu0
    %v240 = vadd.f32 0.0, %v239
    %v241 = vpop.f32.mrb[0].mxu0
    %v242 = vpop.f32.mrb[0].mxu0
    %v243 = vpop.f32.mrb[0].mxu0
    %244 = vdwg.mxu0
    %v245 = vadd.f32 %v137, %v240
    %v246 = vxor.u32 %v245, 2147483648
    %v247 = vmul.f32 %v246, 1.442695
    %v248 = vpow.pop %v247
    %v249 = vadd.f32 %v248, 1.0
    %v250 = vrcp.pop %v249
    %v251 = vmul.f32 1.0, %v250
    %v252 = vtanh.pop %v245
    %v253 = vmul.f32 %v251, 0.0
    %255 = vrot.lane.b32.xlu0 %v252, 64
    %v256 = vpop.permute.xlu0 %255
    %v258 = vmul.f32 %v251, %v256
    %260 = vrot.lane.b32.xlu0 %v258, 32
    %v261 = vpop.permute.xlu0 %260
    %v263 = vadd.f32 %v253, %v261
    %v264 = vtanh.pop %v263
    %266 = vrot.lane.b32.xlu0 %v264, 64
    %v267 = vpop.permute.xlu0 %266
    %v269 = vmul.f32 %v251, %v267
    %v270 = vpack.c.bf16 %v269, %v269
    %272 = vrot.lane.b32.xlu0 %v270, 32
    %v273 = vpop.permute.xlu0 %272
    %v275 = vsel %vm89, %v273, 0
    %277 = vmatprep.subr.bf16.mxu0 0
    %278 = vmatpush1.bf16.msra.mxu0 %v198
    %279 = vmatprep.subr.bf16.mxu0 0
    %280 = vmatpush1.bf16.msra.mxu0 %v199
    %281 = vmatprep.subr.bf16.mxu0 0
    %282 = vmatpush1.bf16.msra.mxu0 0
    %283 = vmatprep.subr.bf16.mxu0 0
    %284 = vmatpush1.bf16.msra.mxu0 0
    %285 = vmatprep.subr.bf16.mxu0 0
    %286 = vmatpush1.bf16.msra.mxu0 0
    %287 = vmatprep.subr.bf16.mxu0 0
    %288 = vmatpush1.bf16.msra.mxu0 0
    %289 = vmatprep.subr.bf16.mxu0 0
    %290 = vmatpush1.bf16.msra.mxu0 0
    %291 = vmatprep.subr.bf16.mxu0 0
    %292 = vmatpush1.bf16.msra.mxu0 0
    %293 = vmatprep.subr.bf16.mxu0 0
    %294 = vmatpush1.bf16.msra.mxu0 0
    %295 = vmatprep.subr.bf16.mxu0 0
    %296 = vmatpush1.bf16.msra.mxu0 0
    %297 = vmatprep.subr.bf16.mxu0 0
    %298 = vmatpush1.bf16.msra.mxu0 0
    %299 = vmatprep.subr.bf16.mxu0 0
    %300 = vmatpush1.bf16.msra.mxu0 0
    %301 = vmatprep.subr.bf16.mxu0 0
    %302 = vmatpush1.bf16.msra.mxu0 0
    %303 = vmatprep.subr.bf16.mxu0 0
    %304 = vmatpush1.bf16.msra.mxu0 0
    %305 = vmatprep.subr.bf16.mxu0 0
    %306 = vmatpush1.bf16.msra.mxu0 0
    %307 = vmatprep.subr.bf16.mxu0 0
    %308 = vmatpush1.bf16.msra.mxu0 0
    %309 = vmatprep.mubr.bf16.mxu0 0
    %310 = vmatmul.mubr.bf16.gmra.mrb[0].mxu0 %v275
    %v311 = vpop.f32.mrb[0].mxu0
    %v312 = vadd.f32 0.0, %v311
    %v313 = vpop.f32.mrb[0].mxu0
    %v314 = vpop.f32.mrb[0].mxu0
    %v315 = vpop.f32.mrb[0].mxu0
    %316 = vdwg.mxu0
    %v317 = vadd.f32 %v140, %v312
    %v318 = vxor.u32 %v317, 2147483648
    %v319 = vmul.f32 %v318, 1.442695
    %v320 = vpow.pop %v319
    %v321 = vadd.f32 %v320, 1.0
    %v322 = vrcp.pop %v321
    %v323 = vmul.f32 1.0, %v322
    %v324 = vtanh.pop %v317
    %v325 = vmul.f32 %v323, %v263
    %327 = vrot.lane.b32.xlu0 %v324, 64
    %v328 = vpop.permute.xlu0 %327
    %v330 = vmul.f32 %v323, %v328
    %332 = vrot.lane.b32.xlu0 %v330, 32
    %v333 = vpop.permute.xlu0 %332
    %v335 = vadd.f32 %v325, %v333
    %v336 = vtanh.pop %v335
    %338 = vrot.lane.b32.xlu0 %v336, 64
    %v339 = vpop.permute.xlu0 %338
    %v341 = vmul.f32 %v323, %v339
    %v342 = vpack.c.bf16 %v341, %v341
    %344 = vrot.lane.b32.xlu0 %v342, 32
    %v345 = vpop.permute.xlu0 %344
    %v347 = vsel %vm89, %v345, 0
    %349 = vmatprep.subr.bf16.mxu0 0
    %350 = vmatpush1.bf16.msra.mxu0 %v198
    %351 = vmatprep.subr.bf16.mxu0 0
    %352 = vmatpush1.bf16.msra.mxu0 %v199
    %353 = vmatprep.subr.bf16.mxu0 0
    %354 = vmatpush1.bf16.msra.mxu0 0
    %355 = vmatprep.subr.bf16.mxu0 0
    %356 = vmatpush1.bf16.msra.mxu0 0
    %357 = vmatprep.subr.bf16.mxu0 0
    %358 = vmatpush1.bf16.msra.mxu0 0
    %359 = vmatprep.subr.bf16.mxu0 0
    %360 = vmatpush1.bf16.msra.mxu0 0
    %361 = vmatprep.subr.bf16.mxu0 0
    %362 = vmatpush1.bf16.msra.mxu0 0
    %363 = vmatprep.subr.bf16.mxu0 0
    %364 = vmatpush1.bf16.msra.mxu0 0
    %365 = vmatprep.subr.bf16.mxu0 0
    %366 = vmatpush1.bf16.msra.mxu0 0
    %367 = vmatprep.subr.bf16.mxu0 0
    %368 = vmatpush1.bf16.msra.mxu0 0
    %369 = vmatprep.subr.bf16.mxu0 0
    %370 = vmatpush1.bf16.msra.mxu0 0
    %371 = vmatprep.subr.bf16.mxu0 0
    %372 = vmatpush1.bf16.msra.mxu0 0
    %373 = vmatprep.subr.bf16.mxu0 0
    %374 = vmatpush1.bf16.msra.mxu0 0
    %375 = vmatprep.subr.bf16.mxu0 0
    %376 = vmatpush1.bf16.msra.mxu0 0
    %377 = vmatprep.subr.bf16.mxu0 0
    %378 = vmatpush1.bf16.msra.mxu0 0
    %379 = vmatprep.subr.bf16.mxu0 0
    %380 = vmatpush1.bf16.msra.mxu0 0
    %381 = vmatprep.mubr.bf16.mxu0 0
    %382 = vmatmul.mubr.bf16.gmra.mrb[0].mxu0 %v347
    %v383 = vpop.f32.mrb[0].mxu0
    %v384 = vadd.f32 0.0, %v383
    %v385 = vpop.f32.mrb[0].mxu0
    %v386 = vpop.f32.mrb[0].mxu0
    %v387 = vpop.f32.mrb[0].mxu0
    %388 = vdwg.mxu0
    %v389 = vadd.f32 %v145, %v384
    %v390 = vxor.u32 %v389, 2147483648
    %v391 = vmul.f32 %v390, 1.442695
    %v392 = vpow.pop %v391
    %v393 = vadd.f32 %v392, 1.0
    %v394 = vrcp.pop %v393
    %v395 = vmul.f32 1.0, %v394
    %v396 = vtanh.pop %v389
    %v397 = vmul.f32 %v395, %v335
    %399 = vrot.lane.b32.xlu0 %v396, 64
    %v400 = vpop.permute.xlu0 %399
    %v402 = vmul.f32 %v395, %v400
    %404 = vrot.lane.b32.xlu0 %v402, 32
    %v405 = vpop.permute.xlu0 %404
    %v407 = vadd.f32 %v397, %v405
    %v408 = vtanh.pop %v407
    %410 = vrot.lane.b32.xlu0 %v408, 64
    %v411 = vpop.permute.xlu0 %410
    %v413 = vmul.f32 %v395, %v411
    %v414 = vpack.c.bf16 %v413, %v413
    %416 = vrot.lane.b32.xlu0 %v414, 32
    %v417 = vpop.permute.xlu0 %416
    %v419 = vsel %vm89, %v417, 0
    %421 = vmatprep.subr.bf16.mxu0 0
    %422 = vmatpush1.bf16.msra.mxu0 %v198
    %423 = vmatprep.subr.bf16.mxu0 0
    %424 = vmatpush1.bf16.msra.mxu0 %v199
    %425 = vmatprep.subr.bf16.mxu0 0
    %426 = vmatpush1.bf16.msra.mxu0 0
    %427 = vmatprep.subr.bf16.mxu0 0
    %428 = vmatpush1.bf16.msra.mxu0 0
    %429 = vmatprep.subr.bf16.mxu0 0
    %430 = vmatpush1.bf16.msra.mxu0 0
    %431 = vmatprep.subr.bf16.mxu0 0
    %432 = vmatpush1.bf16.msra.mxu0 0
    %433 = vmatprep.subr.bf16.mxu0 0
    %434 = vmatpush1.bf16.msra.mxu0 0
    %435 = vmatprep.subr.bf16.mxu0 0
    %436 = vmatpush1.bf16.msra.mxu0 0
    %437 = vmatprep.subr.bf16.mxu0 0
    %438 = vmatpush1.bf16.msra.mxu0 0
    %439 = vmatprep.subr.bf16.mxu0 0
    %440 = vmatpush1.bf16.msra.mxu0 0
    %441 = vmatprep.subr.bf16.mxu0 0
    %442 = vmatpush1.bf16.msra.mxu0 0
    %443 = vmatprep.subr.bf16.mxu0 0
    %444 = vmatpush1.bf16.msra.mxu0 0
    %445 = vmatprep.subr.bf16.mxu0 0
    %446 = vmatpush1.bf16.msra.mxu0 0
    %447 = vmatprep.subr.bf16.mxu0 0
    %448 = vmatpush1.bf16.msra.mxu0 0
    %449 = vmatprep.subr.bf16.mxu0 0
    %450 = vmatpush1.bf16.msra.mxu0 0
    %451 = vmatprep.subr.bf16.mxu0 0
    %452 = vmatpush1.bf16.msra.mxu0 0
    %453 = vmatprep.mubr.bf16.mxu0 0
    %454 = vmatmul.mubr.bf16.gmra.mrb[0].mxu0 %v419
    %v455 = vpop.f32.mrb[0].mxu0
    %v456 = vadd.f32 0.0, %v455
    %v457 = vpop.f32.mrb[0].mxu0
    %v458 = vpop.f32.mrb[0].mxu0
    %v459 = vpop.f32.mrb[0].mxu0
    %460 = vdwg.mxu0
    %v461 = vadd.f32 %v148, %v456
    %v462 = vxor.u32 %v461, 2147483648
    %v463 = vmul.f32 %v462, 1.442695
    %v464 = vpow.pop %v463
    %v465 = vadd.f32 %v464, 1.0
    %v466 = vrcp.pop %v465
    %v467 = vmul.f32 1.0, %v466
    %v468 = vtanh.pop %v461
    %v469 = vmul.f32 %v467, %v407
    %471 = vrot.lane.b32.xlu0 %v468, 64
    %v472 = vpop.permute.xlu0 %471
    %v474 = vmul.f32 %v467, %v472
    %476 = vrot.lane.b32.xlu0 %v474, 32
    %v477 = vpop.permute.xlu0 %476
    %v479 = vadd.f32 %v469, %v477
    %v480 = vtanh.pop %v479
    %482 = vrot.lane.b32.xlu0 %v480, 64
    %v483 = vpop.permute.xlu0 %482
    %v485 = vmul.f32 %v467, %v483
    %v486 = vpack.c.bf16 %v485, %v485
    %488 = vrot.lane.b32.xlu0 %v486, 32
    %v489 = vpop.permute.xlu0 %488
    %v491 = vsel %vm89, %v489, 0
    %493 = vmatprep.subr.bf16.mxu0 0
    %494 = vmatpush1.bf16.msra.mxu0 %v198
    %495 = vmatprep.subr.bf16.mxu0 0
    %496 = vmatpush1.bf16.msra.mxu0 %v199
    %497 = vmatprep.subr.bf16.mxu0 0
    %498 = vmatpush1.bf16.msra.mxu0 0
    %499 = vmatprep.subr.bf16.mxu0 0
    %500 = vmatpush1.bf16.msra.mxu0 0
    %501 = vmatprep.subr.bf16.mxu0 0
    %502 = vmatpush1.bf16.msra.mxu0 0
    %503 = vmatprep.subr.bf16.mxu0 0
    %504 = vmatpush1.bf16.msra.mxu0 0
    %505 = vmatprep.subr.bf16.mxu0 0
    %506 = vmatpush1.bf16.msra.mxu0 0
    %507 = vmatprep.subr.bf16.mxu0 0
    %508 = vmatpush1.bf16.msra.mxu0 0
    %509 = vmatprep.subr.bf16.mxu0 0
    %510 = vmatpush1.bf16.msra.mxu0 0
    %511 = vmatprep.subr.bf16.mxu0 0
    %512 = vmatpush1.bf16.msra.mxu0 0
    %513 = vmatprep.subr.bf16.mxu0 0
    %514 = vmatpush1.bf16.msra.mxu0 0
    %515 = vmatprep.subr.bf16.mxu0 0
    %516 = vmatpush1.bf16.msra.mxu0 0
    %517 = vmatprep.subr.bf16.mxu0 0
    %518 = vmatpush1.bf16.msra.mxu0 0
    %519 = vmatprep.subr.bf16.mxu0 0
    %520 = vmatpush1.bf16.msra.mxu0 0
    %521 = vmatprep.subr.bf16.mxu0 0
    %522 = vmatpush1.bf16.msra.mxu0 0
    %523 = vmatprep.subr.bf16.mxu0 0
    %524 = vmatpush1.bf16.msra.mxu0 0
    %525 = vmatprep.mubr.bf16.mxu0 0
    %526 = vmatmul.mubr.bf16.gmra.mrb[0].mxu0 %v491
    %v527 = vpop.f32.mrb[0].mxu0
    %v528 = vadd.f32 0.0, %v527
    %v529 = vpop.f32.mrb[0].mxu0
    %v530 = vpop.f32.mrb[0].mxu0
    %v531 = vpop.f32.mrb[0].mxu0
    %532 = vdwg.mxu0
    %v533 = vadd.f32 %v153, %v528
    %v534 = vxor.u32 %v533, 2147483648
    %v535 = vmul.f32 %v534, 1.442695
    %v536 = vpow.pop %v535
    %v537 = vadd.f32 %v536, 1.0
    %v538 = vrcp.pop %v537
    %v539 = vmul.f32 1.0, %v538
    %v540 = vtanh.pop %v533
    %v541 = vmul.f32 %v539, %v479
    %543 = vrot.lane.b32.xlu0 %v540, 64
    %v544 = vpop.permute.xlu0 %543
    %v546 = vmul.f32 %v539, %v544
    %548 = vrot.lane.b32.xlu0 %v546, 32
    %v549 = vpop.permute.xlu0 %548
    %v551 = vadd.f32 %v541, %v549
    %v552 = vtanh.pop %v551
    %554 = vrot.lane.b32.xlu0 %v552, 64
    %v555 = vpop.permute.xlu0 %554
    %v557 = vmul.f32 %v539, %v555
    %v558 = vpack.c.bf16 %v557, %v557
    %560 = vrot.lane.b32.xlu0 %v558, 32
    %v561 = vpop.permute.xlu0 %560
    %v563 = vsel %vm89, %v561, 0
    %565 = vmatprep.subr.bf16.mxu0 0
    %566 = vmatpush1.bf16.msra.mxu0 %v198
    %567 = vmatprep.subr.bf16.mxu0 0
    %568 = vmatpush1.bf16.msra.mxu0 %v199
    %569 = vmatprep.subr.bf16.mxu0 0
    %570 = vmatpush1.bf16.msra.mxu0 0
    %571 = vmatprep.subr.bf16.mxu0 0
    %572 = vmatpush1.bf16.msra.mxu0 0
    %573 = vmatprep.subr.bf16.mxu0 0
    %574 = vmatpush1.bf16.msra.mxu0 0
    %575 = vmatprep.subr.bf16.mxu0 0
    %576 = vmatpush1.bf16.msra.mxu0 0
    %577 = vmatprep.subr.bf16.mxu0 0
    %578 = vmatpush1.bf16.msra.mxu0 0
    %579 = vmatprep.subr.bf16.mxu0 0
    %580 = vmatpush1.bf16.msra.mxu0 0
    %581 = vmatprep.subr.bf16.mxu0 0
    %582 = vmatpush1.bf16.msra.mxu0 0
    %583 = vmatprep.subr.bf16.mxu0 0
    %584 = vmatpush1.bf16.msra.mxu0 0
    %585 = vmatprep.subr.bf16.mxu0 0
    %586 = vmatpush1.bf16.msra.mxu0 0
    %587 = vmatprep.subr.bf16.mxu0 0
    %588 = vmatpush1.bf16.msra.mxu0 0
    %589 = vmatprep.subr.bf16.mxu0 0
    %590 = vmatpush1.bf16.msra.mxu0 0
    %591 = vmatprep.subr.bf16.mxu0 0
    %592 = vmatpush1.bf16.msra.mxu0 0
    %593 = vmatprep.subr.bf16.mxu0 0
    %594 = vmatpush1.bf16.msra.mxu0 0
    %595 = vmatprep.subr.bf16.mxu0 0
    %596 = vmatpush1.bf16.msra.mxu0 0
    %597 = vmatprep.mubr.bf16.mxu0 0
    %598 = vmatmul.mubr.bf16.gmra.mrb[0].mxu0 %v563
    %v599 = vpop.f32.mrb[0].mxu0
    %v600 = vadd.f32 0.0, %v599
    %v601 = vpop.f32.mrb[0].mxu0
    %v602 = vpop.f32.mrb[0].mxu0
    %v603 = vpop.f32.mrb[0].mxu0
    %604 = vdwg.mxu0
    %v605 = vadd.f32 %v156, %v600
    %v606 = vxor.u32 %v605, 2147483648
    %v607 = vmul.f32 %v606, 1.442695
    %v608 = vpow.pop %v607
    %v609 = vadd.f32 %v608, 1.0
    %v610 = vrcp.pop %v609
    %v611 = vmul.f32 1.0, %v610
    %v612 = vtanh.pop %v605
    %v613 = vmul.f32 %v611, %v551
    %615 = vrot.lane.b32.xlu0 %v612, 64
    %v616 = vpop.permute.xlu0 %615
    %v618 = vmul.f32 %v611, %v616
    %620 = vrot.lane.b32.xlu0 %v618, 32
    %v621 = vpop.permute.xlu0 %620
    %v623 = vadd.f32 %v613, %v621
    %v624 = vtanh.pop %v623
    %626 = vrot.lane.b32.xlu0 %v624, 64
    %v627 = vpop.permute.xlu0 %626
    %v629 = vmul.f32 %v611, %v627
    %v630 = vpack.c.bf16 %v629, %v629
    %632 = vrot.lane.b32.xlu0 %v630, 32
    %v633 = vpop.permute.xlu0 %632
    %v635 = vsel %vm89, %v633, 0
    %637 = vmatprep.subr.bf16.mxu0 0
    %638 = vmatpush1.bf16.msra.mxu0 %v198
    %639 = vmatprep.subr.bf16.mxu0 0
    %640 = vmatpush1.bf16.msra.mxu0 %v199
    %641 = vmatprep.subr.bf16.mxu0 0
    %642 = vmatpush1.bf16.msra.mxu0 0
    %643 = vmatprep.subr.bf16.mxu0 0
    %644 = vmatpush1.bf16.msra.mxu0 0
    %645 = vmatprep.subr.bf16.mxu0 0
    %646 = vmatpush1.bf16.msra.mxu0 0
    %647 = vmatprep.subr.bf16.mxu0 0
    %648 = vmatpush1.bf16.msra.mxu0 0
    %649 = vmatprep.subr.bf16.mxu0 0
    %650 = vmatpush1.bf16.msra.mxu0 0
    %651 = vmatprep.subr.bf16.mxu0 0
    %652 = vmatpush1.bf16.msra.mxu0 0
    %653 = vmatprep.subr.bf16.mxu0 0
    %654 = vmatpush1.bf16.msra.mxu0 0
    %655 = vmatprep.subr.bf16.mxu0 0
    %656 = vmatpush1.bf16.msra.mxu0 0
    %657 = vmatprep.subr.bf16.mxu0 0
    %658 = vmatpush1.bf16.msra.mxu0 0
    %659 = vmatprep.subr.bf16.mxu0 0
    %660 = vmatpush1.bf16.msra.mxu0 0
    %661 = vmatprep.subr.bf16.mxu0 0
    %662 = vmatpush1.bf16.msra.mxu0 0
    %663 = vmatprep.subr.bf16.mxu0 0
    %664 = vmatpush1.bf16.msra.mxu0 0
    %665 = vmatprep.subr.bf16.mxu0 0
    %666 = vmatpush1.bf16.msra.mxu0 0
    %667 = vmatprep.subr.bf16.mxu0 0
    %668 = vmatpush1.bf16.msra.mxu0 0
    %669 = vmatprep.mubr.bf16.mxu0 0
    %670 = vmatmul.mubr.bf16.gmra.mrb[0].mxu0 %v635
    %v671 = vpop.f32.mrb[0].mxu0
    %v672 = vadd.f32 0.0, %v671
    %v673 = vpop.f32.mrb[0].mxu0
    %v674 = vpop.f32.mrb[0].mxu0
    %v675 = vpop.f32.mrb[0].mxu0
    %676 = vdwg.mxu0
    %v677 = vadd.f32 %v161, %v672
    %v678 = vxor.u32 %v677, 2147483648
    %v679 = vmul.f32 %v678, 1.442695
    %v680 = vpow.pop %v679
    %v681 = vadd.f32 %v680, 1.0
    %v682 = vrcp.pop %v681
    %v683 = vmul.f32 1.0, %v682
    %v684 = vtanh.pop %v677
    %v685 = vmul.f32 %v683, %v623
    %687 = vrot.lane.b32.xlu0 %v684, 64
    %v688 = vpop.permute.xlu0 %687
    %v690 = vmul.f32 %v683, %v688
    %692 = vrot.lane.b32.xlu0 %v690, 32
    %v693 = vpop.permute.xlu0 %692
    %v695 = vadd.f32 %v685, %v693
    %v696 = vtanh.pop %v695
    %698 = vrot.lane.b32.xlu0 %v696, 64
    %v699 = vpop.permute.xlu0 %698
    %v701 = vmul.f32 %v683, %v699
    %v702 = vpack.c.bf16 %v701, %v701
    %704 = vrot.lane.b32.xlu0 %v702, 32
    %v705 = vpop.permute.xlu0 %704
    %v707 = vsel %vm89, %v705, 0
    %709 = vmatprep.subr.bf16.mxu0 0
    %710 = vmatpush1.bf16.msra.mxu0 %v198
    %711 = vmatprep.subr.bf16.mxu0 0
    %712 = vmatpush1.bf16.msra.mxu0 %v199
    %713 = vmatprep.subr.bf16.mxu0 0
    %714 = vmatpush1.bf16.msra.mxu0 0
    %715 = vmatprep.subr.bf16.mxu0 0
    %716 = vmatpush1.bf16.msra.mxu0 0
    %717 = vmatprep.subr.bf16.mxu0 0
    %718 = vmatpush1.bf16.msra.mxu0 0
    %719 = vmatprep.subr.bf16.mxu0 0
    %720 = vmatpush1.bf16.msra.mxu0 0
    %721 = vmatprep.subr.bf16.mxu0 0
    %722 = vmatpush1.bf16.msra.mxu0 0
    %723 = vmatprep.subr.bf16.mxu0 0
    %724 = vmatpush1.bf16.msra.mxu0 0
    %725 = vmatprep.subr.bf16.mxu0 0
    %726 = vmatpush1.bf16.msra.mxu0 0
    %727 = vmatprep.subr.bf16.mxu0 0
    %728 = vmatpush1.bf16.msra.mxu0 0
    %729 = vmatprep.subr.bf16.mxu0 0
    %730 = vmatpush1.bf16.msra.mxu0 0
    %731 = vmatprep.subr.bf16.mxu0 0
    %732 = vmatpush1.bf16.msra.mxu0 0
    %733 = vmatprep.subr.bf16.mxu0 0
    %734 = vmatpush1.bf16.msra.mxu0 0
    %735 = vmatprep.subr.bf16.mxu0 0
    %736 = vmatpush1.bf16.msra.mxu0 0
    %737 = vmatprep.subr.bf16.mxu0 0
    %738 = vmatpush1.bf16.msra.mxu0 0
    %739 = vmatprep.subr.bf16.mxu0 0
    %740 = vmatpush1.bf16.msra.mxu0 0
    %741 = vmatprep.mubr.bf16.mxu0 0
    %742 = vmatmul.mubr.bf16.gmra.mrb[0].mxu0 %v707
    %v743 = vpop.f32.mrb[0].mxu0
    %v744 = vadd.f32 0.0, %v743
    %v745 = vpop.f32.mrb[0].mxu0
    %v746 = vpop.f32.mrb[0].mxu0
    %v747 = vpop.f32.mrb[0].mxu0
    %748 = vdwg.mxu0
    %v749 = vadd.f32 %v164, %v744
    %v750 = vxor.u32 %v749, 2147483648
    %v751 = vmul.f32 %v750, 1.442695
    %v752 = vpow.pop %v751
    %v753 = vadd.f32 %v752, 1.0
    %v754 = vrcp.pop %v753
    %v755 = vmul.f32 1.0, %v754
    %v756 = vtanh.pop %v749
    %v757 = vmul.f32 %v755, %v695
    %759 = vrot.lane.b32.xlu0 %v756, 64
    %v760 = vpop.permute.xlu0 %759
    %v762 = vmul.f32 %v755, %v760
    %764 = vrot.lane.b32.xlu0 %v762, 32
    %v765 = vpop.permute.xlu0 %764
    %v767 = vadd.f32 %v757, %v765
    %v768 = vtanh.pop %v767
    %770 = vrot.lane.b32.xlu0 %v768, 64
    %v771 = vpop.permute.xlu0 %770
    %v773 = vmul.f32 %v755, %v771
    %775 = vrot.lane.b32.xlu0 %v773, 32
    %v776 = vpop.permute.xlu0 %775
    %779 = vrot.lane.b32.xlu0 %v185, 64
    %v780 = vpop.permute.xlu0 %779
    %v782 = vsel %vm89, %v776, %v780
    %v783 = vld [vmem:[%s4] sm:$0xff]
    %v784 = vld [vmem:[%s4 + $0x8] sm:$0xff]
    %v785 = vld [vmem:[%s4 + $0x10] sm:$0xff]
    %v786 = vld [vmem:[%s4 + $0x18] sm:$0xff]
    %v787 = vld [vmem:[%s4 + $0x20] sm:$0xff]
    %v788 = vld [vmem:[%s4 + $0x28] sm:$0xff]
    %v789 = vld [vmem:[%s4 + $0x30] sm:$0xff]
    %v790 = vld [vmem:[%s4 + $0x38] sm:$0xff]
    %v791 = vld [vmem:[%s5] sm:$0x1]
    %v793 = vlaneseq
    %v794 = vshrl.u32 %v793, 7
    %v795 = vsub.s32 0, %v794
    %v796 = vrot.slane %v791, %v795
    %vm798 = vcmask 523264
    %v800 = vsel %vm798, %v782, 0
    %802 = vmatprep.subr.mxu0 0.0
    %803 = vmatpush1.msra.mxu0 %v783
    %804 = vmatprep.subr.mxu0 0.0
    %805 = vmatpush1.msra.mxu0 %v784
    %806 = vmatprep.subr.mxu0 0.0
    %807 = vmatpush1.msra.mxu0 %v785
    %808 = vmatprep.subr.mxu0 0.0
    %809 = vmatpush1.msra.mxu0 %v786
    %810 = vmatprep.subr.mxu0 0.0
    %811 = vmatpush1.msra.mxu0 %v787
    %812 = vmatprep.subr.mxu0 0.0
    %813 = vmatpush1.msra.mxu0 %v788
    %814 = vmatprep.subr.mxu0 0.0
    %815 = vmatpush1.msra.mxu0 %v789
    %816 = vmatprep.subr.mxu0 0.0
    %817 = vmatpush1.msra.mxu0 %v790
    %818 = vmatprep.subr.mxu0 0.0
    %819 = vmatpush1.msra.mxu0 0.0
    %820 = vmatprep.subr.mxu0 0.0
    %821 = vmatpush1.msra.mxu0 0.0
    %822 = vmatprep.subr.mxu0 0.0
    %823 = vmatpush1.msra.mxu0 0.0
    %824 = vmatprep.subr.mxu0 0.0
    %825 = vmatpush1.msra.mxu0 0.0
    %826 = vmatprep.subr.mxu0 0.0
    %827 = vmatpush1.msra.mxu0 0.0
    %828 = vmatprep.subr.mxu0 0.0
    %829 = vmatpush1.msra.mxu0 0.0
    %830 = vmatprep.subr.mxu0 0.0
    %831 = vmatpush1.msra.mxu0 0.0
    %832 = vmatprep.subr.mxu0 0.0
    %833 = vmatpush1.msra.mxu0 0.0
    %834 = vmatprep.subr.mxu0 0.0
    %835 = vmatpush1.msra.mxu0 0.0
    %836 = vmatprep.subr.mxu0 0.0
    %837 = vmatpush1.msra.mxu0 0.0
    %838 = vmatprep.subr.mxu0 0.0
    %839 = vmatpush1.msra.mxu0 0.0
    %840 = vmatprep.subr.mxu0 0.0
    %841 = vmatpush1.msra.mxu0 0.0
    %842 = vmatprep.subr.mxu0 0.0
    %843 = vmatpush1.msra.mxu0 0.0
    %844 = vmatprep.subr.mxu0 0.0
    %845 = vmatpush1.msra.mxu0 0.0
    %846 = vmatprep.subr.mxu0 0.0
    %847 = vmatpush1.msra.mxu0 0.0
    %848 = vmatprep.subr.mxu0 0.0
    %849 = vmatpush1.msra.mxu0 0.0
    %850 = vmatprep.subr.mxu0 0.0
    %851 = vmatpush1.msra.mxu0 0.0
    %852 = vmatprep.subr.mxu0 0.0
    %853 = vmatpush1.msra.mxu0 0.0
    %854 = vmatprep.subr.mxu0 0.0
    %855 = vmatpush1.msra.mxu0 0.0
    %856 = vmatprep.subr.mxu0 0.0
    %857 = vmatpush1.msra.mxu0 0.0
    %858 = vmatprep.subr.mxu0 0.0
    %859 = vmatpush1.msra.mxu0 0.0
    %860 = vmatprep.subr.mxu0 0.0
    %861 = vmatpush1.msra.mxu0 0.0
    %862 = vmatprep.subr.mxu0 0.0
    %863 = vmatpush1.msra.mxu0 0.0
    %864 = vmatprep.subr.mxu0 0.0
    %865 = vmatpush1.msra.mxu0 0.0
    %866 = vmatprep.mubr.f32.mxu0 0.0
    %867 = vmatmul.mubr.f32.gmra.mrb[0].mxu0 %v800
    %v868 = vpop.f32.mrb[0].mxu0
    %v869 = vadd.f32 %v796, %v868
    %v870 = vpop.f32.mrb[0].mxu0
    %871 = vdwg.mxu0
    %vm872 = vcmask 9216
    %873 = vst.msk [vmem:[#allocation2] sm:$0x3] %vm872, %v869
    // Predicated region
    $region26: #{tpu_custom_call.1} parent=1 // pred_check
      _
    $region27: #{tpu_custom_call.1} parent=1 // pred_check_branch
      %875 = sbr.rel (0) target = $region29
    $region28: #{tpu_custom_call.1} parent=1 // pred_region
      %s877 = ssub.s32 32, 32
      %878 = vsyncadd [#allocation3], %s877
      %s880 = sshll.u32 [#allocation2], 4
      %s881 = int_to_ptr.vmem [resolvable:$true] %s880
      %883 = dma.vmem_to_hbm [thread:$0]  %s881, 32, %s6, [#allocation3]
    $region29: #{tpu_custom_call.1} parent=1 // pred_fallthru
      _
    // Predicated region
    $region30: #{tpu_custom_call.1} parent=1 // pred_check
      _
    $region31: #{tpu_custom_call.1} parent=1 // pred_check_branch
      %885 = sbr.rel (0) target = $region33
    $region32: #{tpu_custom_call.1} parent=1 // pred_region
      %886 = dma.done [#allocation3], 32
    $region33: #{tpu_custom_call.1} parent=1 // pred_fallthru
      _
    %887 = vsyncpa [#allocation3], 1

</llo_original>
